<compile_context>
chip_gen: v6e
topology: v6e:2x2x1
jax: 0.10.0
libtpu: 0.0.40
codegen_flags: <defaults>
</compile_context>

<pallas_src>
import jax
import jax.numpy as jnp
from jax import lax
from jax.experimental import pallas as pl
from jax.experimental.pallas import tpu as pltpu


# Contraction-depth target for tap grouping.  256 matches the v6e/v7x MXU;
# set to 128 on v5e (4x128^2 MXU) — 256 is still correct there, just not needed.
CONTRACT_TARGET = 256
CONV_TILE_LP = 512      # pooled rows per grid step (bounded VMEM working set)
FC_TILE_F = 2048        # reduction tile for the final Linear


def _round_up(x, m):
    return ((x + m - 1) // m) * m


def _pick_group(k, c_in, target=CONTRACT_TARGET):
    """Largest divisor G of K with G*C_in <= target (tap-grouped contraction)."""
    for d in range(k, 0, -1):
        if k % d == 0 and d * c_in <= target:
            return d
    return 1


# ----------------------------------------------------------------------------
# Kernel 1: one encoder block = Conv1d (no bias) -> ReLU -> MaxPool1d(k=2,s=2)
# ----------------------------------------------------------------------------
def _make_conv_block_kernel(group, tile_lp, n_groups):
    """Builds the per-block kernel (group/tile sizes baked in as Python ints).

    Refs:
      y_ref  : (L_y, G*C_in)  bf16  tap-grouped, zero-padded input (whole seq,
               resident across the L-tile grid axis for a given batch element)
      w_ref  : (n_groups, G*C_in, C_out) bf16
      o_ref  : (tile_lp, C_out) bf16 pooled+ReLU'd output tile
      acc_ref: (2*tile_lp, C_out) f32 conv accumulator scratch
    """
    tl2 = 2 * tile_lp

    def kernel(y_ref, w_ref, o_ref, acc_ref):
        # conv rows [base, base + 2*tile_lp) feed pooled rows of this tile
        base = pl.multiple_of(pl.program_id(1) * tl2, 8)
        for g in range(n_groups):                       # static unroll, <= 4
            yg = y_ref[pl.ds(base + g * group, tl2), :]       # (tl2, G*C_in)
            contrib = jnp.dot(yg, w_ref[g],
                              preferred_element_type=jnp.float32)
            if g == 0:
                acc_ref[...] = contrib
            else:
                acc_ref[...] += contrib
        # MaxPool1d(kernel=2, stride=2); relu(max(a,b)) == max(relu(a), relu(b))
        even = acc_ref[pl.ds(0, tile_lp, 2), :]
        odd = acc_ref[pl.ds(1, tile_lp, 2), :]
        o_ref[...] = jnp.maximum(jnp.maximum(even, odd), 0.0).astype(o_ref.dtype)

    return kernel


def conv_relu_pool(x_blc, w_kic, pad, *, tile_lp=CONV_TILE_LP):
    """x_blc: (B, L, C_in) channels-last.  Returns (B, L_pool, C_out) bf16."""
    B, L, C_in = x_blc.shape
    K, _, C_out = w_kic.shape

    group = _pick_group(K, C_in)
    n_groups = K // group
    gc = group * C_in

    L_conv = L + 2 * pad - K + 1
    L_pool = L_conv // 2                       # MaxPool1d floor mode
    tile = min(tile_lp, _round_up(L_pool, 8))
    n_t = pl.cdiv(L_pool, tile)
    L_pool_pad = n_t * tile
    L_rows = 2 * L_pool_pad                    # conv rows computed (incl. pad)
    L_xpad = L_rows + K - 1                    # padded-input rows needed
    L_y = L_rows + K - group                   # tap-grouped rows needed
    right = L_xpad - (L + pad)
    assert right >= 0

    x_p = jnp.pad(x_blc.astype(jnp.bfloat16), ((0, 0), (pad, right), (0, 0)))
    # Tap-grouped im2col: channel block j of y holds x_pad[:, l + j, :], so
    # conv row l = sum_g  y[l + g*group] @ w_grouped[g]   (contraction gc).
    y = jnp.concatenate([x_p[:, j:j + L_y, :] for j in range(group)], axis=-1)
    w_g = w_kic.reshape(n_groups, gc, C_out).astype(jnp.bfloat16)

    out = pl.pallas_call(
        _make_conv_block_kernel(group, tile, n_groups),
        out_shape=jax.ShapeDtypeStruct((B, L_pool_pad, C_out), jnp.bfloat16),
        grid_spec=pltpu.PrefetchScalarGridSpec(
            num_scalar_prefetch=0,
            grid=(B, n_t),
            in_specs=[
                # whole (small) sequence resident per batch element; revisited
                # (same block index) across the L-tile axis -> no re-DMA
                pl.BlockSpec((None, L_y, gc), lambda b, t: (b, 0, 0)),
                pl.BlockSpec((n_groups, gc, C_out), lambda b, t: (0, 0, 0)),
            ],
            out_specs=pl.BlockSpec((None, tile, C_out), lambda b, t: (b, t, 0)),
            scratch_shapes=[pltpu.VMEM((2 * tile, C_out), jnp.float32)],
        ),
        compiler_params=pltpu.CompilerParams(
            dimension_semantics=("parallel", "parallel")),
    )(y, w_g)
    return out[:, :L_pool, :]


# ----------------------------------------------------------------------------
# Kernel 2: final Linear, tiled over the F (reduction) dimension
# ----------------------------------------------------------------------------
def _fc_kernel(x_ref, w_ref, b_ref, o_ref, acc_ref):
    @pl.when(pl.program_id(0) == 0)
    def _():
        acc_ref[...] = jnp.zeros_like(acc_ref)

    acc_ref[...] += jnp.dot(x_ref[...], w_ref[...],
                            preferred_element_type=jnp.float32)

    @pl.when(pl.program_id(0) == pl.num_programs(0) - 1)
    def _():
        o_ref[...] = (acc_ref[...] + b_ref[...]).astype(o_ref.dtype)


def fc(x_bf, w_fp, b_p, *, tile_f):
    """x_bf: (B, F) bf16; w_fp: (F_pad, O_pad) bf16; b_p: (1, O_pad) f32."""
    B, F = x_bf.shape
    F_pad, O_pad = w_fp.shape
    if F_pad != F:
        x_bf = jnp.pad(x_bf, ((0, 0), (0, F_pad - F)))
    n_f = F_pad // tile_f
    return pl.pallas_call(
        _fc_kernel,
        out_shape=jax.ShapeDtypeStruct((B, O_pad), jnp.float32),
        grid_spec=pltpu.PrefetchScalarGridSpec(
            num_scalar_prefetch=0,
            grid=(n_f,),
            in_specs=[
                pl.BlockSpec((B, tile_f), lambda f: (0, f)),
                pl.BlockSpec((tile_f, O_pad), lambda f: (f, 0)),
                pl.BlockSpec((1, O_pad), lambda f: (0, 0)),
            ],
            out_specs=pl.BlockSpec((B, O_pad), lambda f: (0, 0)),
            scratch_shapes=[pltpu.VMEM((B, O_pad), jnp.float32)],
        ),
        compiler_params=pltpu.CompilerParams(
            dimension_semantics=("arbitrary",)),
    )(x_bf, w_fp, b_p)


# ----------------------------------------------------------------------------
# Parameters (PyTorch-semantic) + one-time kernel-layout preparation
# ----------------------------------------------------------------------------
def init_params(key, input_channels=1, window=64):
    # (C_in, C_out, kernel, pad) per block, matching ECGEncoder.__init__
    specs = [(input_channels, 64, 32, 16), (64, 128, 16, 8), (128, 256, 8, 4)]
    ks = jax.random.split(key, 5)
    conv_ws, pads = [], []
    for i, (cin, cout, k, pad) in enumerate(specs):
        scale = 1.0 / (cin * k) ** 0.5
        w = jax.random.normal(ks[i], (k, cin, cout), jnp.float32) * scale
        # round to bf16-representable so the kernel's bf16 cast of weights is exact
        conv_ws.append(w.astype(jnp.bfloat16).astype(jnp.float32))
        pads.append(pad)
    F = 256 * (window // 8)
    fc_w = jax.random.normal(ks[3], (F, 80), jnp.float32) * (1.0 / F ** 0.5)
    fc_w = fc_w.astype(jnp.bfloat16).astype(jnp.float32)
    fc_b = jax.random.normal(ks[4], (80,), jnp.float32) * 0.01
    return {"conv_ws": conv_ws, "pads": pads, "fc_w": fc_w, "fc_b": fc_b}


def prepare_params(params, window):
    """One-time transform of PyTorch-layout params to kernel-friendly layout."""
    C_last = params["conv_ws"][-1].shape[-1]       # 256
    L_last = window // 8
    fc_w, fc_b = params["fc_w"], params["fc_b"]
    F, O = fc_w.shape
    assert F == C_last * L_last
    O_pad = _round_up(O, 128)                      # lane-dense fc output
    # PyTorch flattens (B, C, L) -> index c*L + l; our kernels flatten
    # channels-last (B, L, C) -> index l*C + c.  Fold the permutation into fc_w.
    w_cl = fc_w.reshape(C_last, L_last, O).transpose(1, 0, 2).reshape(F, O)
    w_cl = jnp.pad(w_cl, ((0, 0), (0, O_pad - O)))
    tile_f = min(FC_TILE_F, _round_up(F, 128))
    F_pad = pl.cdiv(F, tile_f) * tile_f
    w_cl = jnp.pad(w_cl, ((0, F_pad - F), (0, 0))).astype(jnp.bfloat16)
    b_p = jnp.pad(fc_b, (0, O_pad - O)).reshape(1, O_pad).astype(jnp.float32)
    return {
        "conv_ws": params["conv_ws"],
        "pads": list(params["pads"]),
        "fc_w_p": w_cl,
        "fc_b_p": b_p,
        "fc_tile_f": tile_f,
        "fc_F": F,
        "fc_out": O,
    }


# ----------------------------------------------------------------------------
# Full forward pass
# ----------------------------------------------------------------------------
def ecg_encoder_forward(x_ncl, prepared):
    """x_ncl: (B, C_in, window) like PyTorch.  Returns (B, 80) f32."""
    # TODO(synk): nn.Dropout is identity (eval mode); training-mode masking is
    # not replicated.
    # TODO(synk): the three conv blocks are separate pallas_calls; fusing them
    # into one VMEM-resident kernel would also remove the (small) intermediate
    # HBM round-trips.
    h = jnp.transpose(x_ncl, (0, 2, 1))            # -> (B, L, C) channels-last
    for w_kic, pad in zip(prepared["conv_ws"], prepared["pads"]):
        h = conv_relu_pool(h, w_kic, pad)
    B = h.shape[0]
    flat = h.reshape(B, -1)                        # channels-last flatten
    assert flat.shape[1] == prepared["fc_F"]       # (perm folded into fc_w_p)
    out = fc(flat, prepared["fc_w_p"], prepared["fc_b_p"],
             tile_f=prepared["fc_tile_f"])
    return out[:, :prepared["fc_out"]]


# ----------------------------------------------------------------------------
# Pure-JAX reference (independent path, f32 HIGHEST) for correctness checking
# ----------------------------------------------------------------------------
def ref_forward(x_ncl, params):
    h = x_ncl
    for w_kic, pad in zip(params["conv_ws"], params["pads"]):
        w_oik = jnp.transpose(w_kic, (2, 1, 0))    # (C_out, C_in, K)
        h = lax.conv_general_dilated(
            h, w_oik, window_strides=(1,), padding=[(pad, pad)],
            dimension_numbers=("NCH", "OIH", "NCH"),
            precision=lax.Precision.HIGHEST)
        h = jnp.maximum(h, 0.0)
        L = h.shape[-1]
        Lp = L // 2
        h = h[..., : 2 * Lp].reshape(h.shape[0], h.shape[1], Lp, 2).max(-1)
    flat = h.reshape(h.shape[0], -1)               # PyTorch channel-major flatten
    return jnp.dot(flat, params["fc_w"],
                   precision=lax.Precision.HIGHEST) + params["fc_b"]


if __name__ == "__main__":
    B, C_in, window = 2, 1, 64     # small window, divisible by 8 (mirrors 10000)
    key = jax.random.PRNGKey(0)
    kx, kp = jax.random.split(key)
    x = jax.random.normal(kx, (B, C_in, window), jnp.float32)
    params = init_params(kp, input_channels=C_in, window=window)
    prepared = prepare_params(params, window)

    out = jax.block_until_ready(ecg_encoder_forward(x, prepared))
    assert out.shape == (B, 80), out.shape

    ref = jax.block_until_ready(ref_forward(x, params))
    err = float(jnp.max(jnp.abs(out - ref)))
    # bf16 matmul operands vs f32 HIGHEST reference -> loosened tolerance
    if not bool(jnp.allclose(out, ref, atol=5e-2, rtol=5e-2)):
        raise AssertionError(f"mismatch vs reference: max abs diff {err}")
    print("KERNEL_OK")
</pallas_src>

<mosaic_0001>
module attributes {stable_mosaic.version = 11 : i64} {
  func.func @kernel(%arg0: i32, %arg1: i32, %arg2: memref<1x64x32xbf16, #tpu.memory_space<vmem>>, %arg3: memref<1x32x64xbf16, #tpu.memory_space<vmem>>, %arg4: memref<1x32x64xbf16, #tpu.memory_space<vmem>>, %arg5: memref<64x64xf32, #tpu.memory_space<vmem>>) attributes {dimension_semantics = [#tpu.dimension_semantics<parallel>, #tpu.dimension_semantics<parallel>], iteration_bounds = array<i64: 2, 1>, scalar_prefetch = 0 : i64, scratch_operands = 1 : i64, tpu.core_type = #tpu.core_type<tc>, window_params = [{transform_indices = @transform_0, window_bounds = array<i64: 1, 64, 32>}, {pipeline_mode = #tpu.pipeline_mode<synchronous>, transform_indices = @transform_1, window_bounds = array<i64: 1, 32, 64>}, {transform_indices = @transform_2, window_bounds = array<i64: 1, 32, 64>}]} {
    %c64_i32 = arith.constant 64 : i32
    %0 = arith.muli %arg1, %c64_i32 : i32
    %1 = tpu.assume_multiple %0, 8 : i32
    %c0_i32 = arith.constant 0 : i32
    %2 = arith.addi %1, %c0_i32 : i32
    %c0 = arith.constant 0 : index
    %3 = arith.index_cast %2 : i32 to index
    %c0_0 = arith.constant 0 : index
    %4 = vector.load %arg2[%c0, %3, %c0_0] : memref<1x64x32xbf16, #tpu.memory_space<vmem>>, vector<1x64x32xbf16>
    %5 = vector.shape_cast %4 : vector<1x64x32xbf16> to vector<64x32xbf16>
    %c0_1 = arith.constant 0 : index
    %c0_2 = arith.constant 0 : index
    %c0_3 = arith.constant 0 : index
    %6 = vector.load %arg3[%c0_1, %c0_2, %c0_3] : memref<1x32x64xbf16, #tpu.memory_space<vmem>>, vector<1x32x64xbf16>
    %7 = vector.shape_cast %6 : vector<1x32x64xbf16> to vector<32x64xbf16>
    %cst = arith.constant dense<0.000000e+00> : vector<64x64xf32>
    %8 = tpu.matmul %5, %7, %cst {dimension_numbers = #tpu.dot_dimension_numbers<[1], [0], [0], [1], [0, 0, 1, 1], [], []>} : vector<64x32xbf16>, vector<32x64xbf16>, vector<64x64xf32> -> vector<64x64xf32>
    %c0_4 = arith.constant 0 : index
    %c0_5 = arith.constant 0 : index
    %9 = vector.load %arg5[%c0_4, %c0_5] : memref<64x64xf32, #tpu.memory_space<vmem>>, vector<64x64xf32>
    tpu.vector_store %arg5[%c0_4, %c0_5], %8 {strides = array<i32>} : memref<64x64xf32, #tpu.memory_space<vmem>>, vector<64x64xf32>,
    %c0_6 = arith.constant 0 : index
    %c0_7 = arith.constant 0 : index
    %10 = tpu.strided_load %arg5[%c0_6, %c0_7] {strides = array<i32: 2, 1>} : memref<64x64xf32, #tpu.memory_space<vmem>>, vector<32x64xf32>
    %c1 = arith.constant 1 : index
    %c0_8 = arith.constant 0 : index
    %11 = tpu.strided_load %arg5[%c1, %c0_8] {strides = array<i32: 2, 1>} : memref<64x64xf32, #tpu.memory_space<vmem>>, vector<32x64xf32>
    %12 = arith.maximumf %10, %11 : vector<32x64xf32>
    %cst_9 = arith.constant 0.000000e+00 : f32
    %13 = vector.broadcast %cst_9 : f32 to vector<32x64xf32>
    %14 = arith.maximumf %12, %13 : vector<32x64xf32>
    %15 = arith.truncf %14 : vector<32x64xf32> to vector<32x64xbf16>
    %c0_10 = arith.constant 0 : index
    %c0_11 = arith.constant 0 : index
    %c0_12 = arith.constant 0 : index
    %16 = vector.load %arg4[%c0_10, %c0_11, %c0_12] : memref<1x32x64xbf16, #tpu.memory_space<vmem>>, vector<1x32x64xbf16>
    %17 = vector.shape_cast %16 : vector<1x32x64xbf16> to vector<32x64xbf16>
    %18 = vector.shape_cast %15 : vector<32x64xbf16> to vector<1x32x64xbf16>
    tpu.vector_store %arg4[%c0_10, %c0_11, %c0_12], %18 {strides = array<i32>} : memref<1x32x64xbf16, #tpu.memory_space<vmem>>, vector<1x32x64xbf16>,
    return
  }
  func.func @transform_0(%arg0: i32, %arg1: i32) -> (i32, i32, i32) {
    %c0_i32 = arith.constant 0 : i32
    %c0_i32_0 = arith.constant 0 : i32
    %c0_i32_1 = arith.constant 0 : i32
    return %arg0, %c0_i32, %c0_i32_0 : i32, i32, i32
  }
  func.func @transform_1(%arg0: i32, %arg1: i32) -> (i32, i32, i32) {
    %c0_i32 = arith.constant 0 : i32
    %c0_i32_0 = arith.constant 0 : i32
    %c0_i32_1 = arith.constant 0 : i32
    %c0_i32_2 = arith.constant 0 : i32
    return %c0_i32, %c0_i32_0, %c0_i32_1 : i32, i32, i32
  }
  func.func @transform_2(%arg0: i32, %arg1: i32) -> (i32, i32, i32) {
    %c0_i32 = arith.constant 0 : i32
    %c0_i32_0 = arith.constant 0 : i32
    return %arg0, %arg1, %c0_i32 : i32, i32, i32
  }
}

</mosaic_0001>

<llo_original>
// kernel: tpu_custom_call.1
$region0: #{tpu_custom_call.1}
  #allocation0 [shape = 'u32[]', space=smem, size = 0x4, offset = 0x4, fixed_abs, tag = 'smem constant byte address 0x4 - core index']
  #allocation1 [shape = 'u32[144,128]{1,0:T(1,128)}', space=vmem, size = 0x12000, scoped, tag = 'internal scratch']
  #allocation2 [shape = 'f32[64,64]{1,0:T(8,128)}', space=vmem, size = 0x8000, scoped, tag = 'scratch operand']
  %s0 = inlined_call_operand.vmem [shape: bf16[2,64,32], index: 0, kind: input, shape index: {}]
  %s1 = inlined_call_operand.vmem [shape: bf16[1,32,64], index: 1, kind: input, shape index: {}]
  %s2 = inlined_call_operand.hbm [shape: bf16[2,32,64], index: 2, kind: output, shape index: {}]
  %s3 = sld [smem:[#allocation0]]
  $region41: #{tpu_custom_call.1} parent=0
    _
  %s5 = ssub.s32 1, %s3
  %s6 = scalar_select 0, %s5, %s3
  $region1: #{tpu_custom_call.1} parent=0
    #allocation3 [shape = 'u8[16384]{0}', space=vmem, size = 0x4000, scoped, tag = 'output window, operand 0']
    #allocation4 [shape = 's32[2]{0}', space=sflag, size = 0x8, scoped, tag = 'scoped memory for tpu_custom_call.1']
    %7 = vsyncpa [#allocation4], 0
    %s8 = scalar_lea.sflag [#allocation4], 1
    %9 = vsyncpa %s8, 0
    loop: start=0, step=1, limit=4
    $region2: #{tpu_custom_call.1} parent=1 // loop_pre_header
      _
    $region3: #{tpu_custom_call.1} parent=1 // loop_header
      %s11 = sphi 0, %s15
      %p12 = scmp.ge.s32.totalorder %s11, 4
      %s18 = sphi 0, %s30
      %s19 = sphi 0, %s26
      %s20 = sphi 0, %s18
      %s21 = sphi 0, %s19
      %s22 = sphi 0, %s20
      %s23 = sphi 0, %s21
      %s33 = sphi 0, %s35
      %s36 = sphi 0, %s33
      %s37 = sphi 0, %s36
      %s53 = sphi 0, %s37
      %s57 = sphi 0, %s57
      %s59 = sphi 0, %s57
      %s60 = sphi 0, %s59
      %s74 = sphi 0, %s60
      %s82 = sphi 0, %s84
      %s85 = sphi 0, %s82
      %s86 = sphi 0, %s85
      %s102 = sphi 0, %s86
    $region4: #{tpu_custom_call.1} parent=1 // loop_header_branch
      %14 = sbr.rel (%p12) target = $region8
    $region5: #{tpu_custom_call.1} parent=1 // loop_body
      %s16 = ssub.s32 %s11, 1
      %s17 = ssub.s32 %s11, 2
      %s24 = sadd.s32 1, %s19
      %p25 = scmp.ge.s32.totalorder %s24, 1
      %s26 = scalar_select %p25, 0, %s24
      %s27 = sadd.s32 1, %s18
      %s28 = scalar_select %p25, %s27, %s18
      %p29 = scmp.ge.s32.totalorder %s28, 2
      %s30 = scalar_select %p29, 0, %s28
      %s31 = ssub.s32 %s18, %s30
      %p32 = scmp.eq.s32.totalorder %s31, 0
      %s34 = sadd.s32 %s33, 1
      %s35 = scalar_select %p32, %s33, %s34
      %p38 = pneg %p32
      %p39 = scmp.eq.s32.totalorder %s11, 1
      %p40 = por %p38, %p39
      %p41 = scmp.ne.s32.totalorder %s33, %s36
      %p42 = scmp.eq.s32.totalorder %s11, 0
      %p43 = por %p41, %p42
      %p44 = scmp.ne.s32.totalorder %s33, %s36
      %p45 = scmp.eq.s32.totalorder %s16, 1
      %p46 = por %p44, %p45
      %p47 = scmp.ne.s32.totalorder %s36, %s37
      %p48 = scmp.eq.s32.totalorder %s16, 0
      %p49 = por %p47, %p48
      %p50 = scmp.ne.s32.totalorder %s36, %s37
      %p51 = scmp.eq.s32.totalorder %s17, 1
      %p52 = por %p50, %p51
      %p54 = scmp.ne.s32.totalorder %s37, %s53
      %p55 = scmp.eq.s32.totalorder %s17, 0
      %p56 = por %p54, %p55
      %s58 = sadd.s32 %s57, 1
      %p61 = scmp.eq.s32.totalorder %s11, 1
      %p62 = scmp.ne.s32.totalorder %s57, %s59
      %p63 = scmp.eq.s32.totalorder %s11, 0
      %p64 = por %p62, %p63
      %p65 = scmp.ne.s32.totalorder %s57, %s59
      %p66 = scmp.eq.s32.totalorder %s16, 1
      %p67 = por %p65, %p66
      %p68 = scmp.ne.s32.totalorder %s59, %s60
      %p69 = scmp.eq.s32.totalorder %s16, 0
      %p70 = por %p68, %p69
      %p71 = scmp.ne.s32.totalorder %s59, %s60
      %p72 = scmp.eq.s32.totalorder %s17, 1
      %p73 = por %p71, %p72
      %p75 = scmp.ne.s32.totalorder %s60, %s74
      %p76 = scmp.eq.s32.totalorder %s17, 0
      %p77 = por %p75, %p76
      %s78 = ssub.s32 %s18, %s30
      %s79 = ssub.s32 %s19, %s26
      %s80 = sor.u32 %s78, %s79
      %p81 = scmp.eq.s32.totalorder %s80, 0
      %s83 = sadd.s32 %s82, 1
      %s84 = scalar_select %p81, %s82, %s83
      %p87 = pneg %p81
      %p88 = scmp.eq.s32.totalorder %s11, 1
      %p89 = por %p87, %p88
      %p90 = scmp.ne.s32.totalorder %s82, %s85
      %p91 = scmp.eq.s32.totalorder %s11, 0
      %p92 = por %p90, %p91
      %p93 = scmp.ne.s32.totalorder %s82, %s85
      %p94 = scmp.eq.s32.totalorder %s16, 1
      %p95 = por %p93, %p94
      %p96 = scmp.ne.s32.totalorder %s85, %s86
      %p97 = scmp.eq.s32.totalorder %s16, 0
      %p98 = por %p96, %p97
      %p99 = scmp.ne.s32.totalorder %s85, %s86
      %p100 = scmp.eq.s32.totalorder %s17, 1
      %p101 = por %p99, %p100
      %p103 = scmp.ne.s32.totalorder %s86, %s102
      %p104 = scmp.eq.s32.totalorder %s17, 0
      %p105 = por %p103, %p104
      %p106 = scmp.le.s32.totalorder 1, %s11
      %p107 = scmp.lt.s32.totalorder %s11, 3
      %p108 = pnand %p106, %p107
      %p109 = pneg %p108
      // Predicated region
      $region9: #{tpu_custom_call.1} parent=5 // pred_check
        _
      $region10: #{tpu_custom_call.1} parent=5 // pred_check_branch
        %111 = sbr.rel (%p108) target = $region12
      $region11: #{tpu_custom_call.1} parent=5 // pred_region
        %s112 = ssub.s32 %s11, 1
        // Predicated region
        $region13: #{tpu_custom_call.1} parent=11 // pred_check
          %p113 = pneg %p70
        $region14: #{tpu_custom_call.1} parent=11 // pred_check_branch
          %115 = sbr.rel (%p113) target = $region16
        $region15: #{tpu_custom_call.1} parent=11 // pred_region
          _
        $region16: #{tpu_custom_call.1} parent=11 // pred_fallthru
          _
      $region12: #{tpu_custom_call.1} parent=5 // pred_fallthru
        _
      %p116 = scmp.lt.s32.totalorder %s11, 2
      // Predicated region
      $region17: #{tpu_custom_call.1} parent=5 // pred_check
        %p117 = pneg %p116
      $region18: #{tpu_custom_call.1} parent=5 // pred_check_branch
        %119 = sbr.rel (%p117) target = $region20
      $region19: #{tpu_custom_call.1} parent=5 // pred_region
        // Predicated region
        $region21: #{tpu_custom_call.1} parent=19 // pred_check
          %p120 = pneg %p43
        $region22: #{tpu_custom_call.1} parent=19 // pred_check_branch
          %122 = sbr.rel (%p120) target = $region24
        $region23: #{tpu_custom_call.1} parent=19 // pred_region
          %p123 = scmp.lt.s32.totalorder %s18, 1
          %s124 = scalar_select %p123, %s18, 1
          %s125 = smul.addr %s124, 8
          %s126 = smul.addr %s125, 4
          %s127 = scalar_lea.vmem %s0, %s126
        $region24: #{tpu_custom_call.1} parent=19 // pred_fallthru
          _
      $region20: #{tpu_custom_call.1} parent=5 // pred_fallthru
        _
      %p128 = scmp.le.s32.totalorder 1, %s11
      %p129 = scmp.lt.s32.totalorder %s11, 3
      %p130 = pnand %p128, %p129
      %p131 = pneg %p130
      // Predicated region
      $region25: #{tpu_custom_call.1} parent=5 // pred_check
        _
      $region26: #{tpu_custom_call.1} parent=5 // pred_check_branch
        %133 = sbr.rel (%p130) target = $region28
      $region27: #{tpu_custom_call.1} parent=5 // pred_region
        %s134 = ssub.s32 %s11, 1
        %p135 = scmp.lt.s32.totalorder %s20, 1
        %s136 = scalar_select %p135, %s20, 1
        %s137 = smul.addr %s136, 8
        %s138 = smul.addr %s137, 4
        %s139 = scalar_lea.vmem %s0, %s138
        %p140 = pneg %p49
        %p141 = pneg %p46
        %p142 = pneg %p70
        %p143 = pneg %p67
        %p144 = pneg %p98
        %p145 = pneg %p95
        %s146 = sand.u32 %s85, 1
        %s147 = scalar_lea.sflag [#allocation4], %s146
        %s148 = sand.u32 %s85, 1
        %s149 = smul.addr %s148, 16
        %s150 = scalar_lea.vmem [#allocation3], %s149
        %p151 = scmp.lt.s32.totalorder %s20, 1
        %s152 = scalar_select %p151, %s20, 1
        %s153 = smul.addr %s152, 8
        %s154 = smul.addr %s153, 4
        %s155 = scalar_lea.vmem %s0, %s154
        %s156 = smul.u32 4, %s21
        %s158 = smul.u32 %s21, 64
        %s159 = sshra.s32 %s158, 3
        %s160 = sand.u32 %s158, 7
        %s161 = smul.addr %s159, 4
        %s162 = scalar_lea.vmem %s155, %s161
        %v163 = vld [vmem:[%s162] sm:$0xf]
        %v164 = vld [vmem:[%s162 + $0x4] sm:$0xf]
        %v165 = vld [vmem:[%s162 + $0x8] sm:$0xf]
        %v166 = vld [vmem:[%s162 + $0xc] sm:$0xf]
        %v167 = vld [vmem:[%s162 + $0x10] sm:$0xf]
        %v168 = vld [vmem:[%s162 + $0x14] sm:$0xf]
        %v169 = vld [vmem:[%s162 + $0x18] sm:$0xf]
        %v170 = vld [vmem:[%s162 + $0x1c] sm:$0xf]
        %v171 = vld [vmem:[%s1] sm:$0xf]
        %v172 = vld [vmem:[%s1 + $0x4] sm:$0xf]
        %v173 = vld [vmem:[%s1 + $0x8] sm:$0xf]
        %v174 = vld [vmem:[%s1 + $0xc] sm:$0xf]
        %v183 = vunpack.c.l.b16 %v163
        %v184 = vunpack.c.l.b16 %v164
        %v185 = vunpack.c.l.b16 %v165
        %v186 = vunpack.c.l.b16 %v166
        %v187 = vunpack.c.l.b16 %v167
        %v188 = vunpack.c.l.b16 %v168
        %v189 = vunpack.c.l.b16 %v169
        %v190 = vunpack.c.l.b16 %v170
        %v191 = vpack.c.b16 %v184, %v183
        %v192 = vpack.c.b16 %v186, %v185
        %v193 = vpack.c.b16 %v188, %v187
        %v194 = vpack.c.b16 %v190, %v189
        %v199 = vunpack.c.l.b16 %v171
        %v200 = vunpack.c.l.b16 %v172
        %v201 = vunpack.c.l.b16 %v173
        %v202 = vunpack.c.l.b16 %v174
        %v203 = vpack.c.b16 %v200, %v199
        %v204 = vpack.c.b16 %v202, %v201
        %vm207 = vcmask 261120
        %v209 = vsel %vm207, %v191, 0
        %v212 = vsel %vm207, %v192, 0
        %v215 = vsel %vm207, %v193, 0
        %v218 = vsel %vm207, %v194, 0
        %220 = vmatprep.subr.bf16.mxu0 0
        %221 = vmatpush1.bf16.msra.mxu0 0
        %222 = vmatprep.subr.bf16.mxu0 0
        %223 = vmatpush1.bf16.msra.mxu0 0
        %224 = vmatprep.subr.bf16.mxu0 0
        %225 = vmatpush1.bf16.msra.mxu0 0
        %226 = vmatprep.subr.bf16.mxu0 0
        %227 = vmatpush1.bf16.msra.mxu0 0
        %228 = vmatprep.subr.bf16.mxu0 0
        %229 = vmatpush1.bf16.msra.mxu0 0
        %230 = vmatprep.subr.bf16.mxu0 0
        %231 = vmatpush1.bf16.msra.mxu0 0
        %232 = vmatprep.subr.bf16.mxu0 0
        %233 = vmatpush1.bf16.msra.mxu0 %v204
        %234 = vmatprep.subr.bf16.mxu0 0
        %235 = vmatpush1.bf16.msra.mxu0 %v203
        %236 = vmatprep.subr.bf16.mxu0 0
        %237 = vmatpush2.bf16.msra.mxu0 0
        %238 = vmatprep.subr.bf16.mxu0 0
        %239 = vmatpush2.bf16.msra.mxu0 0
        %240 = vmatprep.subr.bf16.mxu0 0
        %241 = vmatpush2.bf16.msra.mxu0 0
        %242 = vmatprep.subr.bf16.mxu0 0
        %243 = vmatpush2.bf16.msra.mxu0 0
        %244 = vmatprep.subr.bf16.mxu0 0
        %245 = vmatpush2.bf16.msra.mxu0 0
        %246 = vmatprep.subr.bf16.mxu0 0
        %247 = vmatpush2.bf16.msra.mxu0 0
        %248 = vmatprep.subr.bf16.mxu0 0
        %249 = vmatpush2.bf16.msra.mxu0 0
        %250 = vmatprep.subr.bf16.mxu0 0
        %251 = vmatpush2.bf16.msra.mxu0 0
        %252 = vmatprep.mubr.bf16.mxu0 0
        %253 = vmatmul.mubr.bf16.gmra.mxu0 %v209
        %v254 = vpop.f32.mrf.mxu0
        %v255 = vadd.f32 0.0, %v254
        %v256 = vpop.f32.mrf.mxu0
        %v257 = vpop.f32.mrf.mxu0
        %v258 = vadd.f32 0.0, %v257
        %v259 = vpop.f32.mrf.mxu0
        %260 = vmatprep.mubr.bf16.mxu0 0
        %261 = vmatmul.mubr.bf16.gmra.mxu0 %v212
        %v262 = vpop.f32.mrf.mxu0
        %v263 = vadd.f32 0.0, %v262
        %v264 = vpop.f32.mrf.mxu0
        %v265 = vpop.f32.mrf.mxu0
        %v266 = vadd.f32 0.0, %v265
        %v267 = vpop.f32.mrf.mxu0
        %268 = vmatprep.mubr.bf16.mxu0 0
        %269 = vmatmul.mubr.bf16.gmra.mxu0 %v215
        %v270 = vpop.f32.mrf.mxu0
        %v271 = vadd.f32 0.0, %v270
        %v272 = vpop.f32.mrf.mxu0
        %v273 = vpop.f32.mrf.mxu0
        %v274 = vadd.f32 0.0, %v273
        %v275 = vpop.f32.mrf.mxu0
        %276 = vmatprep.mubr.bf16.mxu0 0
        %277 = vmatmul.mubr.bf16.gmra.mxu0 %v218
        %v278 = vpop.f32.mrf.mxu0
        %v279 = vadd.f32 0.0, %v278
        %v280 = vpop.f32.mrf.mxu0
        %v281 = vpop.f32.mrf.mxu0
        %v282 = vadd.f32 0.0, %v281
        %v283 = vpop.f32.mrf.mxu0
        %284 = vdwg.mxu0
        %vm285 = vcmask 523264
        %286 = vst.msk [vmem:[#allocation2] sm:$0xff] %vm285, %v255
        %287 = vst.msk [vmem:[#allocation2 + $0x8] sm:$0xff] %vm285, %v258
        %288 = vst.msk [vmem:[#allocation2 + $0x10] sm:$0xff] %vm285, %v263
        %289 = vst.msk [vmem:[#allocation2 + $0x18] sm:$0xff] %vm285, %v266
        %290 = vst.msk [vmem:[#allocation2 + $0x20] sm:$0xff] %vm285, %v271
        %291 = vst.msk [vmem:[#allocation2 + $0x28] sm:$0xff] %vm285, %v274
        %292 = vst.msk [vmem:[#allocation2 + $0x30] sm:$0xff] %vm285, %v279
        %293 = vst.msk [vmem:[#allocation2 + $0x38] sm:$0xff] %vm285, %v282
        %v294 = vld [vmem:[#allocation2] ss:$2 sm:$0xff]
        %s295 = scalar_lea.vmem [#allocation2], 16
        %v296 = vld [vmem:[%s295] ss:$2 sm:$0xff]
        %s297 = scalar_lea.vmem [#allocation2], 32
        %v298 = vld [vmem:[%s297] ss:$2 sm:$0xff]
        %s299 = scalar_lea.vmem [#allocation2], 48
        %v300 = vld [vmem:[%s299] ss:$2 sm:$0xff]
        %s301 = scalar_lea.vmem [#allocation2], 1
        %v302 = vld [vmem:[%s301] ss:$2 sm:$0xff]
        %s303 = scalar_lea.vmem [#allocation2], 17
        %v304 = vld [vmem:[%s303] ss:$2 sm:$0xff]
        %s305 = scalar_lea.vmem [#allocation2], 33
        %v306 = vld [vmem:[%s305] ss:$2 sm:$0xff]
        %s307 = scalar_lea.vmem [#allocation2], 49
        %v308 = vld [vmem:[%s307] ss:$2 sm:$0xff]
        %v309 = vmax.f32 %v294, %v302
        %v310 = vmax.f32 %v296, %v304
        %v311 = vmax.f32 %v298, %v306
        %v312 = vmax.f32 %v300, %v308
        %v313 = vmax.f32 %v309, 0.0
        %v314 = vmax.f32 %v310, 0.0
        %v315 = vmax.f32 %v311, 0.0
        %v316 = vmax.f32 %v312, 0.0
        %v317 = vpack.c.bf16 %v314, %v313
        %v318 = vpack.c.bf16 %v316, %v315
        %v321 = vunpack.c.l.b16 %v317
        %v322 = vunpack.c.h.b16 %v317
        %v323 = vunpack.c.l.b16 %v318
        %v324 = vunpack.c.h.b16 %v318
        %v325 = vpack.c.b16 %v321, %v321
        %v326 = vpack.c.b16 %v322, %v322
        %v327 = vpack.c.b16 %v323, %v323
        %v328 = vpack.c.b16 %v324, %v324
        %vm333 = vcmask 519168
        %334 = vst.msk [vmem:[%s150] sm:$0xf] %vm333, %v325
        %335 = vst.msk [vmem:[%s150 + $0x4] sm:$0xf] %vm333, %v326
        %336 = vst.msk [vmem:[%s150 + $0x8] sm:$0xf] %vm333, %v327
        %337 = vst.msk [vmem:[%s150 + $0xc] sm:$0xf] %vm333, %v328
        %s338 = sand.u32 %s85, 1
        %s339 = scalar_lea.sflag [#allocation4], %s338
        %s340 = sand.u32 %s85, 1
        %s341 = smul.addr %s340, 16
        %s342 = scalar_lea.vmem [#allocation3], %s341
        // Predicated region
        $region29: #{tpu_custom_call.1} parent=27 // pred_check
          %p343 = pneg %p95
        $region30: #{tpu_custom_call.1} parent=27 // pred_check_branch
          %345 = sbr.rel (%p343) target = $region32
        $region31: #{tpu_custom_call.1} parent=27 // pred_region
          %s346 = smul.u32 4, %s21
          %s348 = ssub.s32 256, 256
          %349 = vsyncadd %s339, %s348
          %s350 = smul.addr %s20, 4
          %s351 = sadd.s32 %s346, %s350
          %s352 = smul.addr %s351, 64
          %s353 = scalar_lea.hbm %s2, %s352
          %s354 = sshll.u32 %s342, 4
          %s355 = int_to_ptr.vmem [resolvable:$true] %s354
          %360 = dma.vmem_to_hbm [thread:$0]  %s355, 256, %s353, %s339, 64, 64, 4
        $region32: #{tpu_custom_call.1} parent=27 // pred_fallthru
          _
      $region28: #{tpu_custom_call.1} parent=5 // pred_fallthru
        _
      %p361 = scmp.le.s32.totalorder 2, %s11
      // Predicated region
      $region33: #{tpu_custom_call.1} parent=5 // pred_check
        %p362 = pneg %p361
      $region34: #{tpu_custom_call.1} parent=5 // pred_check_branch
        %364 = sbr.rel (%p362) target = $region36
      $region35: #{tpu_custom_call.1} parent=5 // pred_region
        %s365 = ssub.s32 %s11, 2
        // Predicated region
        $region37: #{tpu_custom_call.1} parent=35 // pred_check
          %p366 = pneg %p101
        $region38: #{tpu_custom_call.1} parent=35 // pred_check_branch
          %368 = sbr.rel (%p366) target = $region40
        $region39: #{tpu_custom_call.1} parent=35 // pred_region
          %s369 = sand.u32 %s86, 1
          %s370 = scalar_lea.sflag [#allocation4], %s369
          %s371 = sand.u32 %s86, 1
          %s372 = smul.addr %s371, 16
          %s373 = scalar_lea.vmem [#allocation3], %s372
          %374 = dma.done %s370, 256
        $region40: #{tpu_custom_call.1} parent=35 // pred_fallthru
          _
      $region36: #{tpu_custom_call.1} parent=5 // pred_fallthru
        _
    $region6: #{tpu_custom_call.1} parent=1 // loop_footer
      %s15 = sadd.s32 1, %s11
    $region7: #{tpu_custom_call.1} parent=1 // loop_footer_branch
      %10 = sbr.rel target = $region3
    $region8: #{tpu_custom_call.1} parent=1 // loop_exit
      _
    %375 = vsyncpa [#allocation4], 1
    %s376 = scalar_lea.sflag [#allocation4], 1
    %377 = vsyncpa %s376, 1

</llo_original>
